<compile_context>
chip_gen: v7x
topology: tpu7x:2x2x1
jax: 0.10.0
libtpu: 0.0.40
codegen_flags: <defaults>
</compile_context>

<pallas_src>
import functools

import jax
import jax.numpy as jnp
from jax.experimental import pallas as pl
from jax.experimental.pallas import tpu as pltpu

SUBLANE = 8        # f32 sublane tile (batch dim alignment)
TILE_M = 1024      # max batch rows per grid step


def _round_up(n, m):
    return ((n + m - 1) // m) * m


def _pick_matmul_dtype():
    """bf16 matmul inputs on v6e/v7x (native-rate MXU), f32 elsewhere."""
    try:
        kind = jax.devices()[0].device_kind.lower()
    except Exception:
        return jnp.float32
    if "v6" in kind or "v7" in kind or "7x" in kind:
        return jnp.bfloat16
    return jnp.float32


# ---------------------------------------------------------------------------
# Fused MLP kernel: chained (x @ W + b) with ReLU between layers
# ---------------------------------------------------------------------------
def _make_mlp_kernel(n_layers, matmul_dtype):
    def kernel(*refs):
        # refs = (x_ref, w1, b1, w2, b2, ..., wL, bL, o_ref)
        x_ref = refs[0]
        o_ref = refs[-1]
        p = refs[1:-1]
        h = x_ref[...]                                    # f32 activations
        for i in range(n_layers):
            w = p[2 * i][...]                             # (in_f, out_f)
            b = p[2 * i + 1][...]                         # (1, out_f) f32
            h = jnp.dot(h.astype(matmul_dtype), w,
                        preferred_element_type=jnp.float32) + b
            if i < n_layers - 1:                          # last ReLU removed
                h = jnp.maximum(h, 0.0)
        o_ref[...] = h.astype(o_ref.dtype)

    return kernel


# ---------------------------------------------------------------------------
# Parameter init (mirrors nn.Linear's default uniform(-1/sqrt(fan_in), ...))
# ---------------------------------------------------------------------------
def init_params(units_per_layer, key):
    params = []
    for layer_i in range(1, len(units_per_layer)):
        fan_in = units_per_layer[layer_i - 1]
        fan_out = units_per_layer[layer_i]
        key, wk, bk = jax.random.split(key, 3)
        bound = 1.0 / float(fan_in) ** 0.5
        # PyTorch layout: W is (out_features, in_features), b is (out_features,)
        w = jax.random.uniform(wk, (fan_out, fan_in), jnp.float32, -bound, bound)
        b = jax.random.uniform(bk, (fan_out,), jnp.float32, -bound, bound)
        params.append((w, b))
    return params


def pack_params(params, matmul_dtype):
    """One-time: transpose W to (in, out) kernel layout (no feature padding)."""
    packed = []
    dims = []
    for w, b in params:
        out_f, in_f = w.shape
        w_t = jnp.asarray(w.T, matmul_dtype)              # (in_f, out_f)
        b_p = jnp.asarray(b.reshape(1, out_f), jnp.float32)
        packed.append((w_t, b_p))
        dims.append((in_f, out_f))
    return packed, dims


# ---------------------------------------------------------------------------
# Forward pass: single fused pallas_call, batch-tiled "parallel" grid
# ---------------------------------------------------------------------------
def mlp_forward(x, packed, dims, matmul_dtype):
    n_layers = len(packed)
    M, K = x.shape
    assert K == dims[0][0], (K, dims[0][0])
    out_last = dims[-1][1]

    # Batch tile: cap at TILE_M, but keep >= 2 grid steps whenever the batch
    # is big enough to matter (v7x has 2 TCs; extra steps are a cheap loop on
    # v5e/v6e).  tile_m is always a multiple of SUBLANE.
    M_pad = _round_up(M, SUBLANE)
    if M_pad <= 2 * SUBLANE:
        tile_m = M_pad
    else:
        tile_m = min(TILE_M, _round_up(pl.cdiv(M_pad, 2), SUBLANE))
    M_total = _round_up(M_pad, tile_m)
    grid_m = M_total // tile_m

    # Pad only the batch dim (zeros -> bias-propagated garbage rows, sliced off).
    x_in = x if M_total == M else jnp.pad(x, ((0, M_total - M), (0, 0)))

    flat_params = [a for wb in packed for a in wb]

    # x streams per grid step at its true width; weights/biases are full-array
    # blocks with a constant index map -> resident in VMEM across all steps.
    in_specs = [pl.BlockSpec((tile_m, K), lambda i: (i, 0))]
    for w_t, b_p in packed:
        in_specs.append(pl.BlockSpec(w_t.shape, lambda i: (0, 0)))
        in_specs.append(pl.BlockSpec(b_p.shape, lambda i: (0, 0)))

    out = pl.pallas_call(
        _make_mlp_kernel(n_layers, matmul_dtype),
        out_shape=jax.ShapeDtypeStruct((M_total, out_last), jnp.float32),
        grid_spec=pl.GridSpec(
            grid=(grid_m,),
            in_specs=in_specs,
            out_specs=pl.BlockSpec((tile_m, out_last), lambda i: (i, 0)),
        ),
        compiler_params=pltpu.CompilerParams(
            dimension_semantics=("parallel",),
            vmem_limit_bytes=32 * 1024 * 1024,
        ),
    )(x_in, *flat_params)

    return out if M_total == M else out[:M]


def reference_forward(params, x):
    n_layers = len(params)
    for i, (w, b) in enumerate(params):
        x = x @ w.T + b
        if i < n_layers - 1:
            x = jnp.maximum(x, 0.0)
    return x


# ---------------------------------------------------------------------------
if __name__ == "__main__":
    units_per_layer = [16, 32, 32, 8]   # input 16, two hidden 32, 8 logits

    key = jax.random.PRNGKey(0)
    key, xk_small, xk_big, pk = jax.random.split(key, 4)

    matmul_dtype = _pick_matmul_dtype()

    params = init_params(units_per_layer, pk)                  # PyTorch layout
    packed, dims = pack_params(params, matmul_dtype)           # kernel layout

    fwd = jax.jit(functools.partial(mlp_forward, packed=packed, dims=dims,
                                    matmul_dtype=matmul_dtype))

    # bf16 matmul inputs (v6e/v7x) need a looser check; f32 path stays tight.
    tol = 5e-2 if matmul_dtype == jnp.bfloat16 else 1e-4

    # 1) small batch -> single grid step, unpadded feature dims end to end
    x_small = jax.random.normal(xk_small, (4, units_per_layer[0]), jnp.float32)
    logits_small = jax.block_until_ready(fwd(x_small))
    ref_small = jax.block_until_ready(reference_forward(params, x_small))
    assert logits_small.shape == (4, units_per_layer[-1])
    assert jnp.allclose(logits_small, ref_small, atol=tol, rtol=tol), \
        "small-batch mismatch vs reference"

    # 2) larger batch -> 2-step "parallel" batch-tiled grid (both TCs on v7x)
    x_big = jax.random.normal(xk_big, (512, units_per_layer[0]), jnp.float32)
    logits_big = jax.block_until_ready(fwd(x_big))
    ref_big = jax.block_until_ready(reference_forward(params, x_big))
    assert logits_big.shape == (512, units_per_layer[-1])
    assert jnp.allclose(logits_big, ref_big, atol=tol, rtol=tol), \
        "large-batch mismatch vs reference"

    print("KERNEL_OK")
</pallas_src>

<mosaic_0001>
module attributes {stable_mosaic.version = 11 : i64} {
  func.func @kernel(%arg0: i32, %arg1: memref<8x16xf32, #tpu.memory_space<vmem>>, %arg2: memref<16x32xf32, #tpu.memory_space<vmem>>, %arg3: memref<1x32xf32, #tpu.memory_space<vmem>>, %arg4: memref<32x32xf32, #tpu.memory_space<vmem>>, %arg5: memref<1x32xf32, #tpu.memory_space<vmem>>, %arg6: memref<32x8xf32, #tpu.memory_space<vmem>>, %arg7: memref<1x8xf32, #tpu.memory_space<vmem>>, %arg8: memref<8x8xf32, #tpu.memory_space<vmem>>) attributes {dimension_semantics = [#tpu.dimension_semantics<parallel>], iteration_bounds = array<i64: 1>, scalar_prefetch = 0 : i64, scratch_operands = 0 : i64, tpu.core_type = #tpu.core_type<tc>, window_params = [{transform_indices = @transform_0, window_bounds = array<i64: 8, 16>}, {pipeline_mode = #tpu.pipeline_mode<synchronous>, transform_indices = @transform_1, window_bounds = array<i64: 16, 32>}, {pipeline_mode = #tpu.pipeline_mode<synchronous>, transform_indices = @transform_2, window_bounds = array<i64: 1, 32>}, {pipeline_mode = #tpu.pipeline_mode<synchronous>, transform_indices = @transform_3, window_bounds = array<i64: 32, 32>}, {pipeline_mode = #tpu.pipeline_mode<synchronous>, transform_indices = @transform_4, window_bounds = array<i64: 1, 32>}, {pipeline_mode = #tpu.pipeline_mode<synchronous>, transform_indices = @transform_5, window_bounds = array<i64: 32, 8>}, {pipeline_mode = #tpu.pipeline_mode<synchronous>, transform_indices = @transform_6, window_bounds = array<i64: 1, 8>}, {transform_indices = @transform_7, window_bounds = array<i64: 8, 8>}]} {
    %c0 = arith.constant 0 : index
    %c0_0 = arith.constant 0 : index
    %0 = vector.load %arg1[%c0, %c0_0] : memref<8x16xf32, #tpu.memory_space<vmem>>, vector<8x16xf32>
    %c0_1 = arith.constant 0 : index
    %c0_2 = arith.constant 0 : index
    %1 = vector.load %arg2[%c0_1, %c0_2] : memref<16x32xf32, #tpu.memory_space<vmem>>, vector<16x32xf32>
    %c0_3 = arith.constant 0 : index
    %c0_4 = arith.constant 0 : index
    %2 = vector.load %arg3[%c0_3, %c0_4] : memref<1x32xf32, #tpu.memory_space<vmem>>, vector<1x32xf32>
    %cst = arith.constant dense<0.000000e+00> : vector<8x32xf32>
    %3 = tpu.matmul %0, %1, %cst {dimension_numbers = #tpu.dot_dimension_numbers<[1], [0], [0], [1], [0, 0, 1, 1], [], []>} : vector<8x16xf32>, vector<16x32xf32>, vector<8x32xf32> -> vector<8x32xf32>
    %4 = vector.broadcast %2 : vector<1x32xf32> to vector<8x32xf32>
    %5 = arith.addf %3, %4 : vector<8x32xf32>
    %cst_5 = arith.constant 0.000000e+00 : f32
    %6 = vector.broadcast %cst_5 : f32 to vector<8x32xf32>
    %7 = arith.maximumf %5, %6 : vector<8x32xf32>
    %c0_6 = arith.constant 0 : index
    %c0_7 = arith.constant 0 : index
    %8 = vector.load %arg4[%c0_6, %c0_7] : memref<32x32xf32, #tpu.memory_space<vmem>>, vector<32x32xf32>
    %c0_8 = arith.constant 0 : index
    %c0_9 = arith.constant 0 : index
    %9 = vector.load %arg5[%c0_8, %c0_9] : memref<1x32xf32, #tpu.memory_space<vmem>>, vector<1x32xf32>
    %cst_10 = arith.constant dense<0.000000e+00> : vector<8x32xf32>
    %10 = tpu.matmul %7, %8, %cst_10 {dimension_numbers = #tpu.dot_dimension_numbers<[1], [0], [0], [1], [0, 0, 1, 1], [], []>} : vector<8x32xf32>, vector<32x32xf32>, vector<8x32xf32> -> vector<8x32xf32>
    %11 = vector.broadcast %9 : vector<1x32xf32> to vector<8x32xf32>
    %12 = arith.addf %10, %11 : vector<8x32xf32>
    %cst_11 = arith.constant 0.000000e+00 : f32
    %13 = vector.broadcast %cst_11 : f32 to vector<8x32xf32>
    %14 = arith.maximumf %12, %13 : vector<8x32xf32>
    %c0_12 = arith.constant 0 : index
    %c0_13 = arith.constant 0 : index
    %15 = vector.load %arg6[%c0_12, %c0_13] : memref<32x8xf32, #tpu.memory_space<vmem>>, vector<32x8xf32>
    %c0_14 = arith.constant 0 : index
    %c0_15 = arith.constant 0 : index
    %16 = vector.load %arg7[%c0_14, %c0_15] : memref<1x8xf32, #tpu.memory_space<vmem>>, vector<1x8xf32>
    %cst_16 = arith.constant dense<0.000000e+00> : vector<8x8xf32>
    %17 = tpu.matmul %14, %15, %cst_16 {dimension_numbers = #tpu.dot_dimension_numbers<[1], [0], [0], [1], [0, 0, 1, 1], [], []>} : vector<8x32xf32>, vector<32x8xf32>, vector<8x8xf32> -> vector<8x8xf32>
    %18 = vector.broadcast %16 : vector<1x8xf32> to vector<8x8xf32>
    %19 = arith.addf %17, %18 : vector<8x8xf32>
    %c0_17 = arith.constant 0 : index
    %c0_18 = arith.constant 0 : index
    %20 = vector.load %arg8[%c0_17, %c0_18] : memref<8x8xf32, #tpu.memory_space<vmem>>, vector<8x8xf32>
    tpu.vector_store %arg8[%c0_17, %c0_18], %19 {strides = array<i32>} : memref<8x8xf32, #tpu.memory_space<vmem>>, vector<8x8xf32>,
    return
  }
  func.func @transform_0(%arg0: i32) -> (i32, i32) {
    %c0_i32 = arith.constant 0 : i32
    %c0_i32_0 = arith.constant 0 : i32
    return %arg0, %c0_i32 : i32, i32
  }
  func.func @transform_1(%arg0: i32) -> (i32, i32) {
    %c0_i32 = arith.constant 0 : i32
    %c0_i32_0 = arith.constant 0 : i32
    %c0_i32_1 = arith.constant 0 : i32
    return %c0_i32, %c0_i32_0 : i32, i32
  }
  func.func @transform_2(%arg0: i32) -> (i32, i32) {
    %c0_i32 = arith.constant 0 : i32
    %c0_i32_0 = arith.constant 0 : i32
    %c0_i32_1 = arith.constant 0 : i32
    return %c0_i32, %c0_i32_0 : i32, i32
  }
  func.func @transform_3(%arg0: i32) -> (i32, i32) {
    %c0_i32 = arith.constant 0 : i32
    %c0_i32_0 = arith.constant 0 : i32
    %c0_i32_1 = arith.constant 0 : i32
    return %c0_i32, %c0_i32_0 : i32, i32
  }
  func.func @transform_4(%arg0: i32) -> (i32, i32) {
    %c0_i32 = arith.constant 0 : i32
    %c0_i32_0 = arith.constant 0 : i32
    %c0_i32_1 = arith.constant 0 : i32
    return %c0_i32, %c0_i32_0 : i32, i32
  }
  func.func @transform_5(%arg0: i32) -> (i32, i32) {
    %c0_i32 = arith.constant 0 : i32
    %c0_i32_0 = arith.constant 0 : i32
    %c0_i32_1 = arith.constant 0 : i32
    return %c0_i32, %c0_i32_0 : i32, i32
  }
  func.func @transform_6(%arg0: i32) -> (i32, i32) {
    %c0_i32 = arith.constant 0 : i32
    %c0_i32_0 = arith.constant 0 : i32
    %c0_i32_1 = arith.constant 0 : i32
    return %c0_i32, %c0_i32_0 : i32, i32
  }
  func.func @transform_7(%arg0: i32) -> (i32, i32) {
    %c0_i32 = arith.constant 0 : i32
    %c0_i32_0 = arith.constant 0 : i32
    return %arg0, %c0_i32 : i32, i32
  }
}

</mosaic_0001>

<llo_original>
// kernel: mlp_forward.1
$region0: #{mlp_forward.1}
  #allocation0 [shape = 'u32[]', space=smem, size = 0x4, offset = 0x4, fixed_abs, tag = 'smem constant byte address 0x4 - core index']
  #allocation1 [shape = 'u32[144,128]{1,0:T(1,128)}', space=vmem, size = 0x12000, scoped, tag = 'internal scratch']
  %s0 = inlined_call_operand.vmem [shape: f32[8,16], index: 0, kind: input, shape index: {}]
  %s1 = inlined_call_operand.vmem [shape: f32[16,32], index: 1, kind: input, shape index: {}]
  %s2 = inlined_call_operand.vmem [shape: f32[1,32], index: 2, kind: input, shape index: {}]
  %s3 = inlined_call_operand.hbm [shape: f32[32,32], index: 3, kind: input, shape index: {}]
  %s4 = inlined_call_operand.vmem [shape: f32[1,32], index: 4, kind: input, shape index: {}]
  %s5 = inlined_call_operand.hbm [shape: f32[32,8], index: 5, kind: input, shape index: {}]
  %s6 = inlined_call_operand.vmem [shape: f32[1,8], index: 6, kind: input, shape index: {}]
  %s7 = inlined_call_operand.vmem [shape: f32[8,8], index: 7, kind: output, shape index: {}]
  %s8 = sld [smem:[#allocation0]]
  $region46: #{mlp_forward.1} parent=0
    _
  %s10 = ssub.s32 1, %s8
  %s11 = scalar_select 0, %s10, %s8
  $region1: #{mlp_forward.1} parent=0
    #allocation2 [shape = 'u8[16384]{0}', space=vmem, size = 0x4000, scoped, tag = 'input window, operand 3, single buffered']
    #allocation3 [shape = 's32[1]{0}', space=sflag, size = 0x4, scoped, tag = 'scoped memory for mlp_forward.1']
    #allocation4 [shape = 'u8[16384]{0}', space=vmem, size = 0x4000, scoped, tag = 'input window, operand 5, single buffered']
    #allocation5 [shape = 's32[1]{0}', space=sflag, size = 0x4, scoped, tag = 'scoped memory for mlp_forward.1']
    %12 = vsyncpa [#allocation3], 0
    %13 = vsyncpa [#allocation5], 0
    // Predicated region
    $region2: #{mlp_forward.1} parent=1 // pred_check
      _
    $region3: #{mlp_forward.1} parent=1 // pred_check_branch
      %15 = sbr.rel (0) target = $region5
    $region4: #{mlp_forward.1} parent=1 // pred_region
      _
    $region5: #{mlp_forward.1} parent=1 // pred_fallthru
      _
    // Predicated region
    $region6: #{mlp_forward.1} parent=1 // pred_check
      _
    $region7: #{mlp_forward.1} parent=1 // pred_check_branch
      %17 = sbr.rel (0) target = $region9
    $region8: #{mlp_forward.1} parent=1 // pred_region
      _
    $region9: #{mlp_forward.1} parent=1 // pred_fallthru
      _
    // Predicated region
    $region10: #{mlp_forward.1} parent=1 // pred_check
      _
    $region11: #{mlp_forward.1} parent=1 // pred_check_branch
      %19 = sbr.rel (0) target = $region13
    $region12: #{mlp_forward.1} parent=1 // pred_region
      _
    $region13: #{mlp_forward.1} parent=1 // pred_fallthru
      _
    // Predicated region
    $region14: #{mlp_forward.1} parent=1 // pred_check
      _
    $region15: #{mlp_forward.1} parent=1 // pred_check_branch
      %21 = sbr.rel (0) target = $region17
    $region16: #{mlp_forward.1} parent=1 // pred_region
      %s23 = ssub.s32 512, 512
      %24 = vsyncadd [#allocation3], %s23
      %s25 = sshll.u32 [#allocation2], 4
      %s26 = int_to_ptr.vmem [resolvable:$true] %s25
      %31 = dma.hbm_to_vmem [thread:$0]  %s3, 512, %s26, [#allocation3], 128, 128, 8
    $region17: #{mlp_forward.1} parent=1 // pred_fallthru
      _
    // Predicated region
    $region18: #{mlp_forward.1} parent=1 // pred_check
      _
    $region19: #{mlp_forward.1} parent=1 // pred_check_branch
      %33 = sbr.rel (0) target = $region21
    $region20: #{mlp_forward.1} parent=1 // pred_region
      _
    $region21: #{mlp_forward.1} parent=1 // pred_fallthru
      _
    // Predicated region
    $region22: #{mlp_forward.1} parent=1 // pred_check
      _
    $region23: #{mlp_forward.1} parent=1 // pred_check_branch
      %35 = sbr.rel (0) target = $region25
    $region24: #{mlp_forward.1} parent=1 // pred_region
      %s37 = ssub.s32 512, 512
      %38 = vsyncadd [#allocation5], %s37
      %s39 = sshll.u32 [#allocation4], 4
      %s40 = int_to_ptr.vmem [resolvable:$true] %s39
      %45 = dma.hbm_to_vmem [thread:$0]  %s5, 512, %s40, [#allocation5], 128, 128, 8
    $region25: #{mlp_forward.1} parent=1 // pred_fallthru
      _
    // Predicated region
    $region26: #{mlp_forward.1} parent=1 // pred_check
      _
    $region27: #{mlp_forward.1} parent=1 // pred_check_branch
      %47 = sbr.rel (0) target = $region29
    $region28: #{mlp_forward.1} parent=1 // pred_region
      _
    $region29: #{mlp_forward.1} parent=1 // pred_fallthru
      _
    // Predicated region
    $region30: #{mlp_forward.1} parent=1 // pred_check
      _
    $region31: #{mlp_forward.1} parent=1 // pred_check_branch
      %49 = sbr.rel (0) target = $region33
    $region32: #{mlp_forward.1} parent=1 // pred_region
      %50 = dma.done [#allocation3], 512
    $region33: #{mlp_forward.1} parent=1 // pred_fallthru
      _
    // Predicated region
    $region34: #{mlp_forward.1} parent=1 // pred_check
      _
    $region35: #{mlp_forward.1} parent=1 // pred_check_branch
      %52 = sbr.rel (0) target = $region37
    $region36: #{mlp_forward.1} parent=1 // pred_region
      %53 = dma.done [#allocation5], 512
    $region37: #{mlp_forward.1} parent=1 // pred_fallthru
      _
    %v54 = vld [vmem:[%s0] sm:$0xff]
    %v55 = vld [vmem:[%s1] sm:$0xff]
    %v56 = vld [vmem:[%s1 + $0x8] sm:$0xff]
    %v57 = vld [vmem:[%s2] sm:$0x1]
    %v59 = vlaneseq
    %v60 = vshrl.u32 %v59, 7
    %v61 = vsub.s32 0, %v60
    %v62 = vrot.slane %v57, %v61
    %vm64 = vcmask 130048
    %v66 = vsel %vm64, %v54, 0
    %68 = vmatprep.subr.mxu0 0.0
    %69 = vmatpush1.msra.mxu0 %v55
    %70 = vmatprep.subr.mxu0 0.0
    %71 = vmatpush1.msra.mxu0 %v56
    %72 = vmatprep.subr.mxu0 0.0
    %73 = vmatpush1.msra.mxu0 0.0
    %74 = vmatprep.subr.mxu0 0.0
    %75 = vmatpush1.msra.mxu0 0.0
    %76 = vmatprep.subr.mxu0 0.0
    %77 = vmatpush1.msra.mxu0 0.0
    %78 = vmatprep.subr.mxu0 0.0
    %79 = vmatpush1.msra.mxu0 0.0
    %80 = vmatprep.subr.mxu0 0.0
    %81 = vmatpush1.msra.mxu0 0.0
    %82 = vmatprep.subr.mxu0 0.0
    %83 = vmatpush1.msra.mxu0 0.0
    %84 = vmatprep.subr.mxu0 0.0
    %85 = vmatpush1.msra.mxu0 0.0
    %86 = vmatprep.subr.mxu0 0.0
    %87 = vmatpush1.msra.mxu0 0.0
    %88 = vmatprep.subr.mxu0 0.0
    %89 = vmatpush1.msra.mxu0 0.0
    %90 = vmatprep.subr.mxu0 0.0
    %91 = vmatpush1.msra.mxu0 0.0
    %92 = vmatprep.subr.mxu0 0.0
    %93 = vmatpush1.msra.mxu0 0.0
    %94 = vmatprep.subr.mxu0 0.0
    %95 = vmatpush1.msra.mxu0 0.0
    %96 = vmatprep.subr.mxu0 0.0
    %97 = vmatpush1.msra.mxu0 0.0
    %98 = vmatprep.subr.mxu0 0.0
    %99 = vmatpush1.msra.mxu0 0.0
    %100 = vmatprep.subr.mxu0 0.0
    %101 = vmatpush1.msra.mxu0 0.0
    %102 = vmatprep.subr.mxu0 0.0
    %103 = vmatpush1.msra.mxu0 0.0
    %104 = vmatprep.subr.mxu0 0.0
    %105 = vmatpush1.msra.mxu0 0.0
    %106 = vmatprep.subr.mxu0 0.0
    %107 = vmatpush1.msra.mxu0 0.0
    %108 = vmatprep.subr.mxu0 0.0
    %109 = vmatpush1.msra.mxu0 0.0
    %110 = vmatprep.subr.mxu0 0.0
    %111 = vmatpush1.msra.mxu0 0.0
    %112 = vmatprep.subr.mxu0 0.0
    %113 = vmatpush1.msra.mxu0 0.0
    %114 = vmatprep.subr.mxu0 0.0
    %115 = vmatpush1.msra.mxu0 0.0
    %116 = vmatprep.subr.mxu0 0.0
    %117 = vmatpush1.msra.mxu0 0.0
    %118 = vmatprep.subr.mxu0 0.0
    %119 = vmatpush1.msra.mxu0 0.0
    %120 = vmatprep.subr.mxu0 0.0
    %121 = vmatpush1.msra.mxu0 0.0
    %122 = vmatprep.subr.mxu0 0.0
    %123 = vmatpush1.msra.mxu0 0.0
    %124 = vmatprep.subr.mxu0 0.0
    %125 = vmatpush1.msra.mxu0 0.0
    %126 = vmatprep.subr.mxu0 0.0
    %127 = vmatpush1.msra.mxu0 0.0
    %128 = vmatprep.subr.mxu0 0.0
    %129 = vmatpush1.msra.mxu0 0.0
    %130 = vmatprep.subr.mxu0 0.0
    %131 = vmatpush1.msra.mxu0 0.0
    %132 = vmatprep.mubr.f32.mxu0 0.0
    %133 = vmatmul.mubr.f32.gmra.mrb[0].mxu0 %v66
    %v134 = vpop.f32.mrb[0].mxu0
    %v135 = vadd.f32 %v62, %v134
    %v136 = vpop.f32.mrb[0].mxu0
    %137 = vdwg.mxu0
    %v138 = vmax.f32 %v135, 0.0
    %v139 = vld [vmem:[#allocation2] sm:$0xff]
    %v140 = vld [vmem:[#allocation2 + $0x8] sm:$0xff]
    %v141 = vld [vmem:[#allocation2 + $0x10] sm:$0xff]
    %v142 = vld [vmem:[#allocation2 + $0x18] sm:$0xff]
    %v143 = vld [vmem:[%s4] sm:$0x1]
    %v145 = vlaneseq
    %v146 = vshrl.u32 %v145, 7
    %v147 = vsub.s32 0, %v146
    %v148 = vrot.slane %v143, %v147
    %vm150 = vcmask 261120
    %v152 = vsel %vm150, %v138, 0
    %154 = vmatprep.subr.mxu0 0.0
    %155 = vmatpush1.msra.mxu0 %v139
    %156 = vmatprep.subr.mxu0 0.0
    %157 = vmatpush1.msra.mxu0 %v140
    %158 = vmatprep.subr.mxu0 0.0
    %159 = vmatpush1.msra.mxu0 %v141
    %160 = vmatprep.subr.mxu0 0.0
    %161 = vmatpush1.msra.mxu0 %v142
    %162 = vmatprep.subr.mxu0 0.0
    %163 = vmatpush1.msra.mxu0 0.0
    %164 = vmatprep.subr.mxu0 0.0
    %165 = vmatpush1.msra.mxu0 0.0
    %166 = vmatprep.subr.mxu0 0.0
    %167 = vmatpush1.msra.mxu0 0.0
    %168 = vmatprep.subr.mxu0 0.0
    %169 = vmatpush1.msra.mxu0 0.0
    %170 = vmatprep.subr.mxu0 0.0
    %171 = vmatpush1.msra.mxu0 0.0
    %172 = vmatprep.subr.mxu0 0.0
    %173 = vmatpush1.msra.mxu0 0.0
    %174 = vmatprep.subr.mxu0 0.0
    %175 = vmatpush1.msra.mxu0 0.0
    %176 = vmatprep.subr.mxu0 0.0
    %177 = vmatpush1.msra.mxu0 0.0
    %178 = vmatprep.subr.mxu0 0.0
    %179 = vmatpush1.msra.mxu0 0.0
    %180 = vmatprep.subr.mxu0 0.0
    %181 = vmatpush1.msra.mxu0 0.0
    %182 = vmatprep.subr.mxu0 0.0
    %183 = vmatpush1.msra.mxu0 0.0
    %184 = vmatprep.subr.mxu0 0.0
    %185 = vmatpush1.msra.mxu0 0.0
    %186 = vmatprep.subr.mxu0 0.0
    %187 = vmatpush1.msra.mxu0 0.0
    %188 = vmatprep.subr.mxu0 0.0
    %189 = vmatpush1.msra.mxu0 0.0
    %190 = vmatprep.subr.mxu0 0.0
    %191 = vmatpush1.msra.mxu0 0.0
    %192 = vmatprep.subr.mxu0 0.0
    %193 = vmatpush1.msra.mxu0 0.0
    %194 = vmatprep.subr.mxu0 0.0
    %195 = vmatpush1.msra.mxu0 0.0
    %196 = vmatprep.subr.mxu0 0.0
    %197 = vmatpush1.msra.mxu0 0.0
    %198 = vmatprep.subr.mxu0 0.0
    %199 = vmatpush1.msra.mxu0 0.0
    %200 = vmatprep.subr.mxu0 0.0
    %201 = vmatpush1.msra.mxu0 0.0
    %202 = vmatprep.subr.mxu0 0.0
    %203 = vmatpush1.msra.mxu0 0.0
    %204 = vmatprep.subr.mxu0 0.0
    %205 = vmatpush1.msra.mxu0 0.0
    %206 = vmatprep.subr.mxu0 0.0
    %207 = vmatpush1.msra.mxu0 0.0
    %208 = vmatprep.subr.mxu0 0.0
    %209 = vmatpush1.msra.mxu0 0.0
    %210 = vmatprep.subr.mxu0 0.0
    %211 = vmatpush1.msra.mxu0 0.0
    %212 = vmatprep.subr.mxu0 0.0
    %213 = vmatpush1.msra.mxu0 0.0
    %214 = vmatprep.subr.mxu0 0.0
    %215 = vmatpush1.msra.mxu0 0.0
    %216 = vmatprep.subr.mxu0 0.0
    %217 = vmatpush1.msra.mxu0 0.0
    %218 = vmatprep.mubr.f32.mxu0 0.0
    %219 = vmatmul.mubr.f32.gmra.mrb[0].mxu0 %v152
    %v220 = vpop.f32.mrb[0].mxu0
    %v221 = vadd.f32 %v148, %v220
    %v222 = vpop.f32.mrb[0].mxu0
    %223 = vdwg.mxu0
    %v224 = vmax.f32 %v221, 0.0
    %v225 = vld [vmem:[#allocation4] sm:$0xff]
    %v226 = vld [vmem:[#allocation4 + $0x8] sm:$0xff]
    %v227 = vld [vmem:[#allocation4 + $0x10] sm:$0xff]
    %v228 = vld [vmem:[#allocation4 + $0x18] sm:$0xff]
    %v229 = vld [vmem:[%s6] sm:$0x1]
    %v231 = vlaneseq
    %v232 = vshrl.u32 %v231, 7
    %v233 = vsub.s32 0, %v232
    %v234 = vrot.slane %v229, %v233
    %v237 = vsel %vm150, %v224, 0
    %239 = vmatprep.subr.mxu0 0.0
    %240 = vmatpush1.msra.mxu0 %v225
    %241 = vmatprep.subr.mxu0 0.0
    %242 = vmatpush1.msra.mxu0 %v226
    %243 = vmatprep.subr.mxu0 0.0
    %244 = vmatpush1.msra.mxu0 %v227
    %245 = vmatprep.subr.mxu0 0.0
    %246 = vmatpush1.msra.mxu0 %v228
    %247 = vmatprep.subr.mxu0 0.0
    %248 = vmatpush1.msra.mxu0 0.0
    %249 = vmatprep.subr.mxu0 0.0
    %250 = vmatpush1.msra.mxu0 0.0
    %251 = vmatprep.subr.mxu0 0.0
    %252 = vmatpush1.msra.mxu0 0.0
    %253 = vmatprep.subr.mxu0 0.0
    %254 = vmatpush1.msra.mxu0 0.0
    %255 = vmatprep.subr.mxu0 0.0
    %256 = vmatpush1.msra.mxu0 0.0
    %257 = vmatprep.subr.mxu0 0.0
    %258 = vmatpush1.msra.mxu0 0.0
    %259 = vmatprep.subr.mxu0 0.0
    %260 = vmatpush1.msra.mxu0 0.0
    %261 = vmatprep.subr.mxu0 0.0
    %262 = vmatpush1.msra.mxu0 0.0
    %263 = vmatprep.subr.mxu0 0.0
    %264 = vmatpush1.msra.mxu0 0.0
    %265 = vmatprep.subr.mxu0 0.0
    %266 = vmatpush1.msra.mxu0 0.0
    %267 = vmatprep.subr.mxu0 0.0
    %268 = vmatpush1.msra.mxu0 0.0
    %269 = vmatprep.subr.mxu0 0.0
    %270 = vmatpush1.msra.mxu0 0.0
    %271 = vmatprep.subr.mxu0 0.0
    %272 = vmatpush1.msra.mxu0 0.0
    %273 = vmatprep.subr.mxu0 0.0
    %274 = vmatpush1.msra.mxu0 0.0
    %275 = vmatprep.subr.mxu0 0.0
    %276 = vmatpush1.msra.mxu0 0.0
    %277 = vmatprep.subr.mxu0 0.0
    %278 = vmatpush1.msra.mxu0 0.0
    %279 = vmatprep.subr.mxu0 0.0
    %280 = vmatpush1.msra.mxu0 0.0
    %281 = vmatprep.subr.mxu0 0.0
    %282 = vmatpush1.msra.mxu0 0.0
    %283 = vmatprep.subr.mxu0 0.0
    %284 = vmatpush1.msra.mxu0 0.0
    %285 = vmatprep.subr.mxu0 0.0
    %286 = vmatpush1.msra.mxu0 0.0
    %287 = vmatprep.subr.mxu0 0.0
    %288 = vmatpush1.msra.mxu0 0.0
    %289 = vmatprep.subr.mxu0 0.0
    %290 = vmatpush1.msra.mxu0 0.0
    %291 = vmatprep.subr.mxu0 0.0
    %292 = vmatpush1.msra.mxu0 0.0
    %293 = vmatprep.subr.mxu0 0.0
    %294 = vmatpush1.msra.mxu0 0.0
    %295 = vmatprep.subr.mxu0 0.0
    %296 = vmatpush1.msra.mxu0 0.0
    %297 = vmatprep.subr.mxu0 0.0
    %298 = vmatpush1.msra.mxu0 0.0
    %299 = vmatprep.subr.mxu0 0.0
    %300 = vmatpush1.msra.mxu0 0.0
    %301 = vmatprep.subr.mxu0 0.0
    %302 = vmatpush1.msra.mxu0 0.0
    %303 = vmatprep.mubr.f32.mxu0 0.0
    %304 = vmatmul.mubr.f32.gmra.mrb[0].mxu0 %v237
    %v305 = vpop.f32.mrb[0].mxu0
    %v306 = vadd.f32 %v234, %v305
    %v307 = vpop.f32.mrb[0].mxu0
    %308 = vdwg.mxu0
    %vm309 = vcmask 64512
    %310 = vst.msk [vmem:[%s7] sm:$0xff] %vm309, %v306
    // Predicated region
    $region38: #{mlp_forward.1} parent=1 // pred_check
      _
    $region39: #{mlp_forward.1} parent=1 // pred_check_branch
      %312 = sbr.rel (0) target = $region41
    $region40: #{mlp_forward.1} parent=1 // pred_region
      _
    $region41: #{mlp_forward.1} parent=1 // pred_fallthru
      _
    // Predicated region
    $region42: #{mlp_forward.1} parent=1 // pred_check
      _
    $region43: #{mlp_forward.1} parent=1 // pred_check_branch
      %314 = sbr.rel (0) target = $region45
    $region44: #{mlp_forward.1} parent=1 // pred_region
      _
    $region45: #{mlp_forward.1} parent=1 // pred_fallthru
      _
    %315 = vsyncpa [#allocation3], 1
    %316 = vsyncpa [#allocation5], 1

</llo_original>
